<compile_context>
chip_gen: v5e
topology: v5e:2x2
jax: 0.10.0
libtpu: 0.0.40
codegen_flags: <defaults>
</compile_context>

<pallas_src>
import jax
import jax.numpy as jnp
from jax.experimental import pallas as pl
from jax.experimental.pallas import tpu as pltpu


def _round_up(x: int, m: int) -> int:
    return ((x + m - 1) // m) * m


def _round_down(x: int, m: int) -> int:
    return (x // m) * m


def _vmem_capacity_bytes() -> int:
    """Physical VMEM per TensorCore; conservative (v7x, 64 MiB) fallback."""
    try:
        cap = int(pltpu.get_tpu_info().vmem_capacity_bytes)
        if cap > 0:
            return cap
    except Exception:
        pass
    return 64 * 1024 * 1024


def _pick_block_rows(n: int, d: int, in_itemsize: int, out_itemsize: int,
                     budget_bytes: int, x_buffers: int) -> int:
    """Largest multiple-of-128 row tile whose buffered x stream + output blocks
    fit `budget_bytes` (layout-aware: lane padding to 128), capped so large
    problems keep >=4 grid steps. Returns 0 if no viable tile exists."""
    d_lanes = _round_up(d, 128)                       # x lane padding in VMEM
    bytes_per_row = (x_buffers * d_lanes * in_itemsize    # x stream buffers
                     + 2 * 128 * out_itemsize)            # (tm,1) out block pads to 128 lanes
    tm = _round_down(budget_bytes // max(bytes_per_row, 1), 128)
    n_128 = _round_down(n, 128)
    if tm < 128 or n_128 < 128:
        return 0
    tm = min(tm, n_128)
    # >=4 grid steps for large n (v7x megacore + pipeline depth), but never
    # shrink tiles below 1024 rows to get them.
    tm = min(tm, max(1024, _round_down(n_128 // 4, 128)))
    return tm


def _linreg_kernel(x_ref, theta_ref, o_ref):
    # One (tm, d) row tile of x times the resident (d, 1) theta on the MXU,
    # accumulated in f32 and cast to the output dtype.
    o_ref[...] = jnp.dot(
        x_ref[...], theta_ref[...], preferred_element_type=jnp.float32
    ).astype(o_ref.dtype)


def linear_regression_forward(x: jax.Array, theta: jax.Array, *,
                              block_rows: int | None = None,
                              x_buffers: int = 2) -> jax.Array:
    """y = x @ theta.   x: [n, d], theta: [d, 1] -> y: [n, 1]."""
    n, d = x.shape
    assert theta.shape == (d, 1)
    theta = theta.astype(x.dtype)            # tiny; keep one dtype inside the kernel
    out_dtype = x.dtype
    in_item = jnp.dtype(x.dtype).itemsize
    out_item = jnp.dtype(out_dtype).itemsize

    vmem_cap = _vmem_capacity_bytes()
    # Streamed-block budget ~3/8 of VMEM; theta's resident, lane-padded
    # footprint (round_up(d,8) x 128) comes out of the same budget.
    theta_vmem = 2 * _round_up(d, 8) * 128 * in_item
    budget = (3 * vmem_cap) // 8 - theta_vmem

    if block_rows is not None:
        assert block_rows % 128 == 0, "row tile must be a multiple of 128"
        tm = block_rows
    else:
        tm = _pick_block_rows(n, d, in_item, out_item, budget, x_buffers)

    if tm < 128 or n < tm:
        # Tiny n, or d so large that not even a 128-row tile fits the budget:
        # one plain XLA matvec is the sensible path here.
        return jnp.einsum("ij,jk->ik", x, theta).astype(out_dtype)

    n_main = _round_down(n, tm)              # rows handled by the Pallas kernel
    grid = (n_main // tm,)

    x_kwargs = {}
    if x_buffers != 2:                        # opt-in deeper pipelining for tiny blocks
        x_kwargs["pipeline_mode"] = pl.Buffered(x_buffers)

    y_main = pl.pallas_call(
        _linreg_kernel,
        out_shape=jax.ShapeDtypeStruct((n_main, 1), out_dtype),
        grid_spec=pltpu.PrefetchScalarGridSpec(
            num_scalar_prefetch=0,
            grid=grid,
            in_specs=[
                # x is passed whole (no pad / no prefix copy); the grid simply
                # never visits rows >= n_main. Last block dim = full extent d.
                pl.BlockSpec((tm, d), lambda i: (i, 0), **x_kwargs),
                # theta: tiny, resident across all grid steps.
                pl.BlockSpec((d, 1), lambda i: (0, 0)),
            ],
            out_specs=pl.BlockSpec((tm, 1), lambda i: (i, 0)),
        ),
        compiler_params=pltpu.CompilerParams(
            # Independent row tiles -> shard across v7x's two TensorCores.
            dimension_semantics=("parallel",),
            # 3/4 of physical VMEM: 48 MiB on v7x, 96 MiB on v5e/v6e.
            vmem_limit_bytes=(3 * vmem_cap) // 4,
        ),
    )(x, theta)

    if n_main == n:
        return y_main
    # < tm leftover rows: far cheaper as one small XLA matvec than re-copying
    # (padding) the whole of x to a tile multiple.
    y_rest = jnp.einsum("ij,jk->ik", x[n_main:], theta).astype(out_dtype)
    return jnp.concatenate([y_main, y_rest], axis=0)


if __name__ == "__main__":
    key = jax.random.PRNGKey(0)
    kx, kt = jax.random.split(key)

    # n samples x dim features; n is deliberately NOT a tile multiple so the
    # run exercises both the Pallas prefix (2 grid steps) and the XLA remainder.
    n, dim = 2125, 32
    x = jax.random.normal(kx, (n, dim), dtype=jnp.float32)
    theta = jax.random.normal(kt, (dim, 1), dtype=jnp.float32)

    y = jax.jit(linear_regression_forward)(x, theta)
    jax.block_until_ready(y)

    # sanity check against plain-JAX reference
    y_ref = jnp.einsum("ij,jk->ik", x, theta)
    assert y.shape == (n, 1)
    assert jnp.allclose(y, y_ref, atol=1e-4, rtol=1e-4)

    print("KERNEL_OK")
</pallas_src>

<mosaic_0001>
module attributes {stable_mosaic.version = 11 : i64} {
  func.func @_linreg_kernel(%arg0: i32, %arg1: memref<1024x32xf32, #tpu.memory_space<vmem>>, %arg2: memref<32x1xf32, #tpu.memory_space<vmem>>, %arg3: memref<1024x1xf32, #tpu.memory_space<vmem>>) attributes {dimension_semantics = [#tpu.dimension_semantics<parallel>], iteration_bounds = array<i64: 2>, scalar_prefetch = 0 : i64, scratch_operands = 0 : i64, tpu.core_type = #tpu.core_type<tc>, window_params = [{transform_indices = @transform_0, window_bounds = array<i64: 1024, 32>}, {pipeline_mode = #tpu.pipeline_mode<synchronous>, transform_indices = @transform_1, window_bounds = array<i64: 32, 1>}, {transform_indices = @transform_2, window_bounds = array<i64: 1024, 1>}]} {
    %c0 = arith.constant 0 : index
    %c0_0 = arith.constant 0 : index
    %0 = vector.load %arg1[%c0, %c0_0] : memref<1024x32xf32, #tpu.memory_space<vmem>>, vector<1024x32xf32>
    %c0_1 = arith.constant 0 : index
    %c0_2 = arith.constant 0 : index
    %1 = vector.load %arg2[%c0_1, %c0_2] : memref<32x1xf32, #tpu.memory_space<vmem>>, vector<32x1xf32>
    %cst = arith.constant dense<0.000000e+00> : vector<1024x1xf32>
    %2 = tpu.matmul %0, %1, %cst {dimension_numbers = #tpu.dot_dimension_numbers<[1], [0], [0], [1], [0, 0, 1, 1], [], []>} : vector<1024x32xf32>, vector<32x1xf32>, vector<1024x1xf32> -> vector<1024x1xf32>
    %c0_3 = arith.constant 0 : index
    %c0_4 = arith.constant 0 : index
    %3 = vector.load %arg3[%c0_3, %c0_4] : memref<1024x1xf32, #tpu.memory_space<vmem>>, vector<1024x1xf32>
    tpu.vector_store %arg3[%c0_3, %c0_4], %2 {strides = array<i32>} : memref<1024x1xf32, #tpu.memory_space<vmem>>, vector<1024x1xf32>,
    return
  }
  func.func @transform_0(%arg0: i32) -> (i32, i32) {
    %c0_i32 = arith.constant 0 : i32
    %c0_i32_0 = arith.constant 0 : i32
    return %arg0, %c0_i32 : i32, i32
  }
  func.func @transform_1(%arg0: i32) -> (i32, i32) {
    %c0_i32 = arith.constant 0 : i32
    %c0_i32_0 = arith.constant 0 : i32
    %c0_i32_1 = arith.constant 0 : i32
    return %c0_i32, %c0_i32_0 : i32, i32
  }
  func.func @transform_2(%arg0: i32) -> (i32, i32) {
    %c0_i32 = arith.constant 0 : i32
    %c0_i32_0 = arith.constant 0 : i32
    return %arg0, %c0_i32 : i32, i32
  }
}

</mosaic_0001>

<llo_original>
// kernel: linear_regression_forward.1
$region0: #{linear_regression_forward.1}
  #allocation0 [shape = 'u32[]', space=smem, size = 0x4, offset = 0x4, fixed_abs, tag = 'smem constant byte address 0x4 - core index']
  #allocation1 [shape = 'u32[72,128]{1,0:T(1,128)}', space=vmem, size = 0x9000, scoped, tag = 'internal scratch']
  %s0 = inlined_call_operand.vmem [shape: f32[2125,32], index: 0, kind: input, shape index: {}]
  %s1 = inlined_call_operand.vmem [shape: f32[32,1], index: 1, kind: input, shape index: {}]
  %s2 = inlined_call_operand.vmem [shape: f32[2048,1], index: 2, kind: output, shape index: {}]
  %s3 = sld [smem:[#allocation0]]
  $region41: #{linear_regression_forward.1} parent=0
    _
  %s5 = ssub.s32 1, %s3
  %s6 = scalar_select 0, %s5, %s3
  loop: start=0, step=1, limit=4
  $region2: #{linear_regression_forward.1} parent=0 // loop_pre_header
    _
  $region3: #{linear_regression_forward.1} parent=0 // loop_header
    %s8 = sphi 0, %s12
    %p9 = scmp.ge.s32.totalorder %s8, 4
    %s18 = sphi 0, %s20
    %s21 = sphi 0, %s18
    %s22 = sphi 0, %s21
    %s38 = sphi 0, %s22
    %s42 = sphi 0, %s42
    %s44 = sphi 0, %s42
    %s45 = sphi 0, %s44
    %s59 = sphi 0, %s45
    %s65 = sphi 0, %s67
    %s68 = sphi 0, %s65
    %s69 = sphi 0, %s68
    %s85 = sphi 0, %s69
  $region4: #{linear_regression_forward.1} parent=0 // loop_header_branch
    %11 = sbr.rel (%p9) target = $region8
  $region5: #{linear_regression_forward.1} parent=0 // loop_body
    %s13 = ssub.s32 %s8, 1
    %s14 = ssub.s32 %s8, 2
    %s15 = sadd.s32 %s8, 1
    %s16 = ssub.s32 %s8, %s15
    %p17 = scmp.eq.s32.totalorder %s16, 0
    %s19 = sadd.s32 %s18, 1
    %s20 = scalar_select %p17, %s18, %s19
    %p23 = pneg %p17
    %p24 = scmp.eq.s32.totalorder %s8, 1
    %p25 = por %p23, %p24
    %p26 = scmp.ne.s32.totalorder %s18, %s21
    %p27 = scmp.eq.s32.totalorder %s8, 0
    %p28 = por %p26, %p27
    %p29 = scmp.ne.s32.totalorder %s18, %s21
    %p30 = scmp.eq.s32.totalorder %s13, 1
    %p31 = por %p29, %p30
    %p32 = scmp.ne.s32.totalorder %s21, %s22
    %p33 = scmp.eq.s32.totalorder %s13, 0
    %p34 = por %p32, %p33
    %p35 = scmp.ne.s32.totalorder %s21, %s22
    %p36 = scmp.eq.s32.totalorder %s14, 1
    %p37 = por %p35, %p36
    %p39 = scmp.ne.s32.totalorder %s22, %s38
    %p40 = scmp.eq.s32.totalorder %s14, 0
    %p41 = por %p39, %p40
    %s43 = sadd.s32 %s42, 1
    %p46 = scmp.eq.s32.totalorder %s8, 1
    %p47 = scmp.ne.s32.totalorder %s42, %s44
    %p48 = scmp.eq.s32.totalorder %s8, 0
    %p49 = por %p47, %p48
    %p50 = scmp.ne.s32.totalorder %s42, %s44
    %p51 = scmp.eq.s32.totalorder %s13, 1
    %p52 = por %p50, %p51
    %p53 = scmp.ne.s32.totalorder %s44, %s45
    %p54 = scmp.eq.s32.totalorder %s13, 0
    %p55 = por %p53, %p54
    %p56 = scmp.ne.s32.totalorder %s44, %s45
    %p57 = scmp.eq.s32.totalorder %s14, 1
    %p58 = por %p56, %p57
    %p60 = scmp.ne.s32.totalorder %s45, %s59
    %p61 = scmp.eq.s32.totalorder %s14, 0
    %p62 = por %p60, %p61
    %s63 = ssub.s32 %s8, %s15
    %p64 = scmp.eq.s32.totalorder %s63, 0
    %s66 = sadd.s32 %s65, 1
    %s67 = scalar_select %p64, %s65, %s66
    %p70 = pneg %p64
    %p71 = scmp.eq.s32.totalorder %s8, 1
    %p72 = por %p70, %p71
    %p73 = scmp.ne.s32.totalorder %s65, %s68
    %p74 = scmp.eq.s32.totalorder %s8, 0
    %p75 = por %p73, %p74
    %p76 = scmp.ne.s32.totalorder %s65, %s68
    %p77 = scmp.eq.s32.totalorder %s13, 1
    %p78 = por %p76, %p77
    %p79 = scmp.ne.s32.totalorder %s68, %s69
    %p80 = scmp.eq.s32.totalorder %s13, 0
    %p81 = por %p79, %p80
    %p82 = scmp.ne.s32.totalorder %s68, %s69
    %p83 = scmp.eq.s32.totalorder %s14, 1
    %p84 = por %p82, %p83
    %p86 = scmp.ne.s32.totalorder %s69, %s85
    %p87 = scmp.eq.s32.totalorder %s14, 0
    %p88 = por %p86, %p87
    %p89 = scmp.le.s32.totalorder 1, %s8
    %p90 = scmp.lt.s32.totalorder %s8, 3
    %p91 = pnand %p89, %p90
    %p92 = pneg %p91
    // Predicated region
    $region9: #{linear_regression_forward.1} parent=5 // pred_check
      _
    $region10: #{linear_regression_forward.1} parent=5 // pred_check_branch
      %94 = sbr.rel (%p91) target = $region12
    $region11: #{linear_regression_forward.1} parent=5 // pred_region
      %s95 = ssub.s32 %s8, 1
      // Predicated region
      $region13: #{linear_regression_forward.1} parent=11 // pred_check
        %p96 = pneg %p55
      $region14: #{linear_regression_forward.1} parent=11 // pred_check_branch
        %98 = sbr.rel (%p96) target = $region16
      $region15: #{linear_regression_forward.1} parent=11 // pred_region
        _
      $region16: #{linear_regression_forward.1} parent=11 // pred_fallthru
        _
    $region12: #{linear_regression_forward.1} parent=5 // pred_fallthru
      _
    %p99 = scmp.lt.s32.totalorder %s8, 2
    // Predicated region
    $region17: #{linear_regression_forward.1} parent=5 // pred_check
      %p100 = pneg %p99
    $region18: #{linear_regression_forward.1} parent=5 // pred_check_branch
      %102 = sbr.rel (%p100) target = $region20
    $region19: #{linear_regression_forward.1} parent=5 // pred_region
      // Predicated region
      $region21: #{linear_regression_forward.1} parent=19 // pred_check
        %p103 = pneg %p28
      $region22: #{linear_regression_forward.1} parent=19 // pred_check_branch
        %105 = sbr.rel (%p103) target = $region24
      $region23: #{linear_regression_forward.1} parent=19 // pred_region
        %s106 = smul.u32 128, %s8
        %s107 = ssub.s32 266, %s106
        %p108 = scmp.lt.s32.totalorder %s107, 128
        %s109 = scalar_select %p108, %s107, 128
        %s110 = smul.u32 8, %s109
        %p111 = scmp.lt.s32.totalorder %s106, 265
        %s112 = scalar_select %p111, %s106, 265
        %s113 = smul.addr %s112, 8
        %s114 = scalar_lea.vmem %s0, %s113
        %s115 = smul.u32 128, %s8
        %s116 = ssub.s32 266, %s115
        %p117 = scmp.lt.s32.totalorder %s116, 128
        %s118 = scalar_select %p117, %s116, 128
        %s119 = smul.u32 8, %s118
      $region24: #{linear_regression_forward.1} parent=19 // pred_fallthru
        _
    $region20: #{linear_regression_forward.1} parent=5 // pred_fallthru
      _
    %p120 = scmp.le.s32.totalorder 1, %s8
    %p121 = scmp.lt.s32.totalorder %s8, 3
    %p122 = pnand %p120, %p121
    %p123 = pneg %p122
    // Predicated region
    $region25: #{linear_regression_forward.1} parent=5 // pred_check
      _
    $region26: #{linear_regression_forward.1} parent=5 // pred_check_branch
      %125 = sbr.rel (%p122) target = $region28
    $region27: #{linear_regression_forward.1} parent=5 // pred_region
      %s126 = ssub.s32 %s8, 1
      %s127 = smul.u32 128, %s13
      %s128 = ssub.s32 266, %s127
      %p129 = scmp.lt.s32.totalorder %s128, 128
      %s130 = scalar_select %p129, %s128, 128
      %s131 = smul.u32 8, %s130
      %p132 = scmp.lt.s32.totalorder %s127, 265
      %s133 = scalar_select %p132, %s127, 265
      %s134 = smul.addr %s133, 8
      %s135 = scalar_lea.vmem %s0, %s134
      %p136 = pneg %p34
      %p137 = pneg %p31
      %p138 = pneg %p55
      %p139 = pneg %p52
      %p140 = pneg %p81
      %p141 = pneg %p78
      %s142 = smul.u32 128, %s13
      %p143 = scmp.lt.s32.totalorder %s142, 255
      %s144 = scalar_select %p143, %s142, 255
      %s145 = smul.addr %s144, 8
      %s146 = scalar_lea.vmem %s2, %s145
      %s147 = smul.u32 128, %s13
      %s148 = ssub.s32 266, %s147
      %p149 = scmp.lt.s32.totalorder %s148, 128
      %s150 = scalar_select %p149, %s148, 128
      %s151 = smul.u32 8, %s150
      %p152 = scmp.lt.s32.totalorder %s147, 265
      %s153 = scalar_select %p152, %s147, 265
      %s154 = smul.addr %s153, 8
      %s155 = scalar_lea.vmem %s0, %s154
      %s156 = smul.u32 128, %s13
      %s157 = ssub.s32 266, %s156
      %p158 = scmp.lt.s32.totalorder %s157, 128
      %s159 = scalar_select %p158, %s157, 128
      %s160 = smul.u32 8, %s159
      %s161 = smul.u32 128, %s13
      %p162 = scmp.lt.s32.totalorder %s161, 255
      %s163 = scalar_select %p162, %s161, 255
      %s164 = smul.addr %s163, 8
      %s165 = scalar_lea.vmem %s2, %s164
      %s166 = smul.u32 128, %s13
      %v167 = vld [vmem:[%s155] sm:$0xff]
      %v168 = vld [vmem:[%s155 + $0x8] sm:$0xff]
      %v169 = vld [vmem:[%s155 + $0x10] sm:$0xff]
      %v170 = vld [vmem:[%s155 + $0x18] sm:$0xff]
      %v171 = vld [vmem:[%s155 + $0x20] sm:$0xff]
      %v172 = vld [vmem:[%s155 + $0x28] sm:$0xff]
      %v173 = vld [vmem:[%s155 + $0x30] sm:$0xff]
      %v174 = vld [vmem:[%s155 + $0x38] sm:$0xff]
      %v175 = vld [vmem:[%s155 + $0x40] sm:$0xff]
      %v176 = vld [vmem:[%s155 + $0x48] sm:$0xff]
      %v177 = vld [vmem:[%s155 + $0x50] sm:$0xff]
      %v178 = vld [vmem:[%s155 + $0x58] sm:$0xff]
      %v179 = vld [vmem:[%s155 + $0x60] sm:$0xff]
      %v180 = vld [vmem:[%s155 + $0x68] sm:$0xff]
      %v181 = vld [vmem:[%s155 + $0x70] sm:$0xff]
      %v182 = vld [vmem:[%s155 + $0x78] sm:$0xff]
      %v183 = vld [vmem:[%s155 + $0x80] sm:$0xff]
      %v184 = vld [vmem:[%s155 + $0x88] sm:$0xff]
      %v185 = vld [vmem:[%s155 + $0x90] sm:$0xff]
      %v186 = vld [vmem:[%s155 + $0x98] sm:$0xff]
      %v187 = vld [vmem:[%s155 + $0xa0] sm:$0xff]
      %v188 = vld [vmem:[%s155 + $0xa8] sm:$0xff]
      %v189 = vld [vmem:[%s155 + $0xb0] sm:$0xff]
      %v190 = vld [vmem:[%s155 + $0xb8] sm:$0xff]
      %v191 = vld [vmem:[%s155 + $0xc0] sm:$0xff]
      %v192 = vld [vmem:[%s155 + $0xc8] sm:$0xff]
      %v193 = vld [vmem:[%s155 + $0xd0] sm:$0xff]
      %v194 = vld [vmem:[%s155 + $0xd8] sm:$0xff]
      %v195 = vld [vmem:[%s155 + $0xe0] sm:$0xff]
      %v196 = vld [vmem:[%s155 + $0xe8] sm:$0xff]
      %v197 = vld [vmem:[%s155 + $0xf0] sm:$0xff]
      %v198 = vld [vmem:[%s155 + $0xf8] sm:$0xff]
      %v199 = vld [vmem:[%s155 + $0x100] sm:$0xff]
      %v200 = vld [vmem:[%s155 + $0x108] sm:$0xff]
      %v201 = vld [vmem:[%s155 + $0x110] sm:$0xff]
      %v202 = vld [vmem:[%s155 + $0x118] sm:$0xff]
      %v203 = vld [vmem:[%s155 + $0x120] sm:$0xff]
      %v204 = vld [vmem:[%s155 + $0x128] sm:$0xff]
      %v205 = vld [vmem:[%s155 + $0x130] sm:$0xff]
      %v206 = vld [vmem:[%s155 + $0x138] sm:$0xff]
      %v207 = vld [vmem:[%s155 + $0x140] sm:$0xff]
      %v208 = vld [vmem:[%s155 + $0x148] sm:$0xff]
      %v209 = vld [vmem:[%s155 + $0x150] sm:$0xff]
      %v210 = vld [vmem:[%s155 + $0x158] sm:$0xff]
      %v211 = vld [vmem:[%s155 + $0x160] sm:$0xff]
      %v212 = vld [vmem:[%s155 + $0x168] sm:$0xff]
      %v213 = vld [vmem:[%s155 + $0x170] sm:$0xff]
      %v214 = vld [vmem:[%s155 + $0x178] sm:$0xff]
      %v215 = vld [vmem:[%s155 + $0x180] sm:$0xff]
      %v216 = vld [vmem:[%s155 + $0x188] sm:$0xff]
      %v217 = vld [vmem:[%s155 + $0x190] sm:$0xff]
      %v218 = vld [vmem:[%s155 + $0x198] sm:$0xff]
      %v219 = vld [vmem:[%s155 + $0x1a0] sm:$0xff]
      %v220 = vld [vmem:[%s155 + $0x1a8] sm:$0xff]
      %v221 = vld [vmem:[%s155 + $0x1b0] sm:$0xff]
      %v222 = vld [vmem:[%s155 + $0x1b8] sm:$0xff]
      %v223 = vld [vmem:[%s155 + $0x1c0] sm:$0xff]
      %v224 = vld [vmem:[%s155 + $0x1c8] sm:$0xff]
      %v225 = vld [vmem:[%s155 + $0x1d0] sm:$0xff]
      %v226 = vld [vmem:[%s155 + $0x1d8] sm:$0xff]
      %v227 = vld [vmem:[%s155 + $0x1e0] sm:$0xff]
      %v228 = vld [vmem:[%s155 + $0x1e8] sm:$0xff]
      %v229 = vld [vmem:[%s155 + $0x1f0] sm:$0xff]
      %v230 = vld [vmem:[%s155 + $0x1f8] sm:$0xff]
      %v231 = vld [vmem:[%s155 + $0x200] sm:$0xff]
      %v232 = vld [vmem:[%s155 + $0x208] sm:$0xff]
      %v233 = vld [vmem:[%s155 + $0x210] sm:$0xff]
      %v234 = vld [vmem:[%s155 + $0x218] sm:$0xff]
      %v235 = vld [vmem:[%s155 + $0x220] sm:$0xff]
      %v236 = vld [vmem:[%s155 + $0x228] sm:$0xff]
      %v237 = vld [vmem:[%s155 + $0x230] sm:$0xff]
      %v238 = vld [vmem:[%s155 + $0x238] sm:$0xff]
      %v239 = vld [vmem:[%s155 + $0x240] sm:$0xff]
      %v240 = vld [vmem:[%s155 + $0x248] sm:$0xff]
      %v241 = vld [vmem:[%s155 + $0x250] sm:$0xff]
      %v242 = vld [vmem:[%s155 + $0x258] sm:$0xff]
      %v243 = vld [vmem:[%s155 + $0x260] sm:$0xff]
      %v244 = vld [vmem:[%s155 + $0x268] sm:$0xff]
      %v245 = vld [vmem:[%s155 + $0x270] sm:$0xff]
      %v246 = vld [vmem:[%s155 + $0x278] sm:$0xff]
      %v247 = vld [vmem:[%s155 + $0x280] sm:$0xff]
      %v248 = vld [vmem:[%s155 + $0x288] sm:$0xff]
      %v249 = vld [vmem:[%s155 + $0x290] sm:$0xff]
      %v250 = vld [vmem:[%s155 + $0x298] sm:$0xff]
      %v251 = vld [vmem:[%s155 + $0x2a0] sm:$0xff]
      %v252 = vld [vmem:[%s155 + $0x2a8] sm:$0xff]
      %v253 = vld [vmem:[%s155 + $0x2b0] sm:$0xff]
      %v254 = vld [vmem:[%s155 + $0x2b8] sm:$0xff]
      %v255 = vld [vmem:[%s155 + $0x2c0] sm:$0xff]
      %v256 = vld [vmem:[%s155 + $0x2c8] sm:$0xff]
      %v257 = vld [vmem:[%s155 + $0x2d0] sm:$0xff]
      %v258 = vld [vmem:[%s155 + $0x2d8] sm:$0xff]
      %v259 = vld [vmem:[%s155 + $0x2e0] sm:$0xff]
      %v260 = vld [vmem:[%s155 + $0x2e8] sm:$0xff]
      %v261 = vld [vmem:[%s155 + $0x2f0] sm:$0xff]
      %v262 = vld [vmem:[%s155 + $0x2f8] sm:$0xff]
      %v263 = vld [vmem:[%s155 + $0x300] sm:$0xff]
      %v264 = vld [vmem:[%s155 + $0x308] sm:$0xff]
      %v265 = vld [vmem:[%s155 + $0x310] sm:$0xff]
      %v266 = vld [vmem:[%s155 + $0x318] sm:$0xff]
      %v267 = vld [vmem:[%s155 + $0x320] sm:$0xff]
      %v268 = vld [vmem:[%s155 + $0x328] sm:$0xff]
      %v269 = vld [vmem:[%s155 + $0x330] sm:$0xff]
      %v270 = vld [vmem:[%s155 + $0x338] sm:$0xff]
      %v271 = vld [vmem:[%s155 + $0x340] sm:$0xff]
      %v272 = vld [vmem:[%s155 + $0x348] sm:$0xff]
      %v273 = vld [vmem:[%s155 + $0x350] sm:$0xff]
      %v274 = vld [vmem:[%s155 + $0x358] sm:$0xff]
      %v275 = vld [vmem:[%s155 + $0x360] sm:$0xff]
      %v276 = vld [vmem:[%s155 + $0x368] sm:$0xff]
      %v277 = vld [vmem:[%s155 + $0x370] sm:$0xff]
      %v278 = vld [vmem:[%s155 + $0x378] sm:$0xff]
      %v279 = vld [vmem:[%s155 + $0x380] sm:$0xff]
      %v280 = vld [vmem:[%s155 + $0x388] sm:$0xff]
      %v281 = vld [vmem:[%s155 + $0x390] sm:$0xff]
      %v282 = vld [vmem:[%s155 + $0x398] sm:$0xff]
      %v283 = vld [vmem:[%s155 + $0x3a0] sm:$0xff]
      %v284 = vld [vmem:[%s155 + $0x3a8] sm:$0xff]
      %v285 = vld [vmem:[%s155 + $0x3b0] sm:$0xff]
      %v286 = vld [vmem:[%s155 + $0x3b8] sm:$0xff]
      %v287 = vld [vmem:[%s155 + $0x3c0] sm:$0xff]
      %v288 = vld [vmem:[%s155 + $0x3c8] sm:$0xff]
      %v289 = vld [vmem:[%s155 + $0x3d0] sm:$0xff]
      %v290 = vld [vmem:[%s155 + $0x3d8] sm:$0xff]
      %v291 = vld [vmem:[%s155 + $0x3e0] sm:$0xff]
      %v292 = vld [vmem:[%s155 + $0x3e8] sm:$0xff]
      %v293 = vld [vmem:[%s155 + $0x3f0] sm:$0xff]
      %v294 = vld [vmem:[%s155 + $0x3f8] sm:$0xff]
      %v295 = vld [vmem:[%s1] sm:$0xff]
      %v296 = vld [vmem:[%s1 + $0x8] sm:$0xff]
      %v297 = vld [vmem:[%s1 + $0x10] sm:$0xff]
      %v298 = vld [vmem:[%s1 + $0x18] sm:$0xff]
      %vm299 = vcmask 261120
      %v301 = vsel %vm299, %v167, 0
      %v304 = vsel %vm299, %v168, 0
      %v307 = vsel %vm299, %v169, 0
      %v310 = vsel %vm299, %v170, 0
      %v313 = vsel %vm299, %v171, 0
      %v316 = vsel %vm299, %v172, 0
      %v319 = vsel %vm299, %v173, 0
      %v322 = vsel %vm299, %v174, 0
      %v325 = vsel %vm299, %v175, 0
      %v328 = vsel %vm299, %v176, 0
      %v331 = vsel %vm299, %v177, 0
      %v334 = vsel %vm299, %v178, 0
      %v337 = vsel %vm299, %v179, 0
      %v340 = vsel %vm299, %v180, 0
      %v343 = vsel %vm299, %v181, 0
      %v346 = vsel %vm299, %v182, 0
      %v349 = vsel %vm299, %v183, 0
      %v352 = vsel %vm299, %v184, 0
      %v355 = vsel %vm299, %v185, 0
      %v358 = vsel %vm299, %v186, 0
      %v361 = vsel %vm299, %v187, 0
      %v364 = vsel %vm299, %v188, 0
      %v367 = vsel %vm299, %v189, 0
      %v370 = vsel %vm299, %v190, 0
      %v373 = vsel %vm299, %v191, 0
      %v376 = vsel %vm299, %v192, 0
      %v379 = vsel %vm299, %v193, 0
      %v382 = vsel %vm299, %v194, 0
      %v385 = vsel %vm299, %v195, 0
      %v388 = vsel %vm299, %v196, 0
      %v391 = vsel %vm299, %v197, 0
      %v394 = vsel %vm299, %v198, 0
      %v397 = vsel %vm299, %v199, 0
      %v400 = vsel %vm299, %v200, 0
      %v403 = vsel %vm299, %v201, 0
      %v406 = vsel %vm299, %v202, 0
      %v409 = vsel %vm299, %v203, 0
      %v412 = vsel %vm299, %v204, 0
      %v415 = vsel %vm299, %v205, 0
      %v418 = vsel %vm299, %v206, 0
      %v421 = vsel %vm299, %v207, 0
      %v424 = vsel %vm299, %v208, 0
      %v427 = vsel %vm299, %v209, 0
      %v430 = vsel %vm299, %v210, 0
      %v433 = vsel %vm299, %v211, 0
      %v436 = vsel %vm299, %v212, 0
      %v439 = vsel %vm299, %v213, 0
      %v442 = vsel %vm299, %v214, 0
      %v445 = vsel %vm299, %v215, 0
      %v448 = vsel %vm299, %v216, 0
      %v451 = vsel %vm299, %v217, 0
      %v454 = vsel %vm299, %v218, 0
      %v457 = vsel %vm299, %v219, 0
      %v460 = vsel %vm299, %v220, 0
      %v463 = vsel %vm299, %v221, 0
      %v466 = vsel %vm299, %v222, 0
      %v469 = vsel %vm299, %v223, 0
      %v472 = vsel %vm299, %v224, 0
      %v475 = vsel %vm299, %v225, 0
      %v478 = vsel %vm299, %v226, 0
      %v481 = vsel %vm299, %v227, 0
      %v484 = vsel %vm299, %v228, 0
      %v487 = vsel %vm299, %v229, 0
      %v490 = vsel %vm299, %v230, 0
      %v493 = vsel %vm299, %v231, 0
      %v496 = vsel %vm299, %v232, 0
      %v499 = vsel %vm299, %v233, 0
      %v502 = vsel %vm299, %v234, 0
      %v505 = vsel %vm299, %v235, 0
      %v508 = vsel %vm299, %v236, 0
      %v511 = vsel %vm299, %v237, 0
      %v514 = vsel %vm299, %v238, 0
      %v517 = vsel %vm299, %v239, 0
      %v520 = vsel %vm299, %v240, 0
      %v523 = vsel %vm299, %v241, 0
      %v526 = vsel %vm299, %v242, 0
      %v529 = vsel %vm299, %v243, 0
      %v532 = vsel %vm299, %v244, 0
      %v535 = vsel %vm299, %v245, 0
      %v538 = vsel %vm299, %v246, 0
      %v541 = vsel %vm299, %v247, 0
      %v544 = vsel %vm299, %v248, 0
      %v547 = vsel %vm299, %v249, 0
      %v550 = vsel %vm299, %v250, 0
      %v553 = vsel %vm299, %v251, 0
      %v556 = vsel %vm299, %v252, 0
      %v559 = vsel %vm299, %v253, 0
      %v562 = vsel %vm299, %v254, 0
      %v565 = vsel %vm299, %v255, 0
      %v568 = vsel %vm299, %v256, 0
      %v571 = vsel %vm299, %v257, 0
      %v574 = vsel %vm299, %v258, 0
      %v577 = vsel %vm299, %v259, 0
      %v580 = vsel %vm299, %v260, 0
      %v583 = vsel %vm299, %v261, 0
      %v586 = vsel %vm299, %v262, 0
      %v589 = vsel %vm299, %v263, 0
      %v592 = vsel %vm299, %v264, 0
      %v595 = vsel %vm299, %v265, 0
      %v598 = vsel %vm299, %v266, 0
      %v601 = vsel %vm299, %v267, 0
      %v604 = vsel %vm299, %v268, 0
      %v607 = vsel %vm299, %v269, 0
      %v610 = vsel %vm299, %v270, 0
      %v613 = vsel %vm299, %v271, 0
      %v616 = vsel %vm299, %v272, 0
      %v619 = vsel %vm299, %v273, 0
      %v622 = vsel %vm299, %v274, 0
      %v625 = vsel %vm299, %v275, 0
      %v628 = vsel %vm299, %v276, 0
      %v631 = vsel %vm299, %v277, 0
      %v634 = vsel %vm299, %v278, 0
      %v637 = vsel %vm299, %v279, 0
      %v640 = vsel %vm299, %v280, 0
      %v643 = vsel %vm299, %v281, 0
      %v646 = vsel %vm299, %v282, 0
      %v649 = vsel %vm299, %v283, 0
      %v652 = vsel %vm299, %v284, 0
      %v655 = vsel %vm299, %v285, 0
      %v658 = vsel %vm299, %v286, 0
      %v661 = vsel %vm299, %v287, 0
      %v664 = vsel %vm299, %v288, 0
      %v667 = vsel %vm299, %v289, 0
      %v670 = vsel %vm299, %v290, 0
      %v673 = vsel %vm299, %v291, 0
      %v676 = vsel %vm299, %v292, 0
      %v679 = vsel %vm299, %v293, 0
      %v682 = vsel %vm299, %v294, 0
      %684 = vmatpush.msra.mxu0 0.0
      %685 = vmatpush.msra.mxu0 0.0
      %686 = vmatpush.msra.mxu0 0.0
      %687 = vmatpush.msra.mxu0 0.0
      %688 = vmatpush.msra.mxu0 0.0
      %689 = vmatpush.msra.mxu0 0.0
      %690 = vmatpush.msra.mxu0 0.0
      %691 = vmatpush.msra.mxu0 0.0
      %692 = vmatpush.msra.mxu0 0.0
      %693 = vmatpush.msra.mxu0 0.0
      %694 = vmatpush.msra.mxu0 0.0
      %695 = vmatpush.msra.mxu0 0.0
      %696 = vmatpush.msra.mxu0 %v298
      %697 = vmatpush.msra.mxu0 %v297
      %698 = vmatpush.msra.mxu0 %v296
      %699 = vmatpush.msra.mxu0 %v295
      %700 = vmatmul.f32.gmra.mxu0 %v301
      %v701 = vpop.f32.mrf.mxu0
      %v702 = vadd.f32 0.0, %v701
      %703 = vmatmul.f32.gmra.mxu0 %v304
      %v704 = vpop.f32.mrf.mxu0
      %v705 = vadd.f32 0.0, %v704
      %706 = vmatmul.f32.gmra.mxu0 %v307
      %v707 = vpop.f32.mrf.mxu0
      %v708 = vadd.f32 0.0, %v707
      %709 = vmatmul.f32.gmra.mxu0 %v310
      %v710 = vpop.f32.mrf.mxu0
      %v711 = vadd.f32 0.0, %v710
      %712 = vmatmul.f32.gmra.mxu0 %v313
      %v713 = vpop.f32.mrf.mxu0
      %v714 = vadd.f32 0.0, %v713
      %715 = vmatmul.f32.gmra.mxu0 %v316
      %v716 = vpop.f32.mrf.mxu0
      %v717 = vadd.f32 0.0, %v716
      %718 = vmatmul.f32.gmra.mxu0 %v319
      %v719 = vpop.f32.mrf.mxu0
      %v720 = vadd.f32 0.0, %v719
      %721 = vmatmul.f32.gmra.mxu0 %v322
      %v722 = vpop.f32.mrf.mxu0
      %v723 = vadd.f32 0.0, %v722
      %724 = vmatmul.f32.gmra.mxu0 %v325
      %v725 = vpop.f32.mrf.mxu0
      %v726 = vadd.f32 0.0, %v725
      %727 = vmatmul.f32.gmra.mxu0 %v328
      %v728 = vpop.f32.mrf.mxu0
      %v729 = vadd.f32 0.0, %v728
      %730 = vmatmul.f32.gmra.mxu0 %v331
      %v731 = vpop.f32.mrf.mxu0
      %v732 = vadd.f32 0.0, %v731
      %733 = vmatmul.f32.gmra.mxu0 %v334
      %v734 = vpop.f32.mrf.mxu0
      %v735 = vadd.f32 0.0, %v734
      %736 = vmatmul.f32.gmra.mxu0 %v337
      %v737 = vpop.f32.mrf.mxu0
      %v738 = vadd.f32 0.0, %v737
      %739 = vmatmul.f32.gmra.mxu0 %v340
      %v740 = vpop.f32.mrf.mxu0
      %v741 = vadd.f32 0.0, %v740
      %742 = vmatmul.f32.gmra.mxu0 %v343
      %v743 = vpop.f32.mrf.mxu0
      %v744 = vadd.f32 0.0, %v743
      %745 = vmatmul.f32.gmra.mxu0 %v346
      %v746 = vpop.f32.mrf.mxu0
      %v747 = vadd.f32 0.0, %v746
      %748 = vmatmul.f32.gmra.mxu0 %v349
      %v749 = vpop.f32.mrf.mxu0
      %v750 = vadd.f32 0.0, %v749
      %751 = vmatmul.f32.gmra.mxu0 %v352
      %v752 = vpop.f32.mrf.mxu0
      %v753 = vadd.f32 0.0, %v752
      %754 = vmatmul.f32.gmra.mxu0 %v355
      %v755 = vpop.f32.mrf.mxu0
      %v756 = vadd.f32 0.0, %v755
      %757 = vmatmul.f32.gmra.mxu0 %v358
      %v758 = vpop.f32.mrf.mxu0
      %v759 = vadd.f32 0.0, %v758
      %760 = vmatmul.f32.gmra.mxu0 %v361
      %v761 = vpop.f32.mrf.mxu0
      %v762 = vadd.f32 0.0, %v761
      %763 = vmatmul.f32.gmra.mxu0 %v364
      %v764 = vpop.f32.mrf.mxu0
      %v765 = vadd.f32 0.0, %v764
      %766 = vmatmul.f32.gmra.mxu0 %v367
      %v767 = vpop.f32.mrf.mxu0
      %v768 = vadd.f32 0.0, %v767
      %769 = vmatmul.f32.gmra.mxu0 %v370
      %v770 = vpop.f32.mrf.mxu0
      %v771 = vadd.f32 0.0, %v770
      %772 = vmatmul.f32.gmra.mxu0 %v373
      %v773 = vpop.f32.mrf.mxu0
      %v774 = vadd.f32 0.0, %v773
      %775 = vmatmul.f32.gmra.mxu0 %v376
      %v776 = vpop.f32.mrf.mxu0
      %v777 = vadd.f32 0.0, %v776
      %778 = vmatmul.f32.gmra.mxu0 %v379
      %v779 = vpop.f32.mrf.mxu0
      %v780 = vadd.f32 0.0, %v779
      %781 = vmatmul.f32.gmra.mxu0 %v382
      %v782 = vpop.f32.mrf.mxu0
      %v783 = vadd.f32 0.0, %v782
      %784 = vmatmul.f32.gmra.mxu0 %v385
      %v785 = vpop.f32.mrf.mxu0
      %v786 = vadd.f32 0.0, %v785
      %787 = vmatmul.f32.gmra.mxu0 %v388
      %v788 = vpop.f32.mrf.mxu0
      %v789 = vadd.f32 0.0, %v788
      %790 = vmatmul.f32.gmra.mxu0 %v391
      %v791 = vpop.f32.mrf.mxu0
      %v792 = vadd.f32 0.0, %v791
      %793 = vmatmul.f32.gmra.mxu0 %v394
      %v794 = vpop.f32.mrf.mxu0
      %v795 = vadd.f32 0.0, %v794
      %796 = vmatmul.f32.gmra.mxu0 %v397
      %v797 = vpop.f32.mrf.mxu0
      %v798 = vadd.f32 0.0, %v797
      %799 = vmatmul.f32.gmra.mxu0 %v400
      %v800 = vpop.f32.mrf.mxu0
      %v801 = vadd.f32 0.0, %v800
      %802 = vmatmul.f32.gmra.mxu0 %v403
      %v803 = vpop.f32.mrf.mxu0
      %v804 = vadd.f32 0.0, %v803
      %805 = vmatmul.f32.gmra.mxu0 %v406
      %v806 = vpop.f32.mrf.mxu0
      %v807 = vadd.f32 0.0, %v806
      %808 = vmatmul.f32.gmra.mxu0 %v409
      %v809 = vpop.f32.mrf.mxu0
      %v810 = vadd.f32 0.0, %v809
      %811 = vmatmul.f32.gmra.mxu0 %v412
      %v812 = vpop.f32.mrf.mxu0
      %v813 = vadd.f32 0.0, %v812
      %814 = vmatmul.f32.gmra.mxu0 %v415
      %v815 = vpop.f32.mrf.mxu0
      %v816 = vadd.f32 0.0, %v815
      %817 = vmatmul.f32.gmra.mxu0 %v418
      %v818 = vpop.f32.mrf.mxu0
      %v819 = vadd.f32 0.0, %v818
      %820 = vmatmul.f32.gmra.mxu0 %v421
      %v821 = vpop.f32.mrf.mxu0
      %v822 = vadd.f32 0.0, %v821
      %823 = vmatmul.f32.gmra.mxu0 %v424
      %v824 = vpop.f32.mrf.mxu0
      %v825 = vadd.f32 0.0, %v824
      %826 = vmatmul.f32.gmra.mxu0 %v427
      %v827 = vpop.f32.mrf.mxu0
      %v828 = vadd.f32 0.0, %v827
      %829 = vmatmul.f32.gmra.mxu0 %v430
      %v830 = vpop.f32.mrf.mxu0
      %v831 = vadd.f32 0.0, %v830
      %832 = vmatmul.f32.gmra.mxu0 %v433
      %v833 = vpop.f32.mrf.mxu0
      %v834 = vadd.f32 0.0, %v833
      %835 = vmatmul.f32.gmra.mxu0 %v436
      %v836 = vpop.f32.mrf.mxu0
      %v837 = vadd.f32 0.0, %v836
      %838 = vmatmul.f32.gmra.mxu0 %v439
      %v839 = vpop.f32.mrf.mxu0
      %v840 = vadd.f32 0.0, %v839
      %841 = vmatmul.f32.gmra.mxu0 %v442
      %v842 = vpop.f32.mrf.mxu0
      %v843 = vadd.f32 0.0, %v842
      %844 = vmatmul.f32.gmra.mxu0 %v445
      %v845 = vpop.f32.mrf.mxu0
      %v846 = vadd.f32 0.0, %v845
      %847 = vmatmul.f32.gmra.mxu0 %v448
      %v848 = vpop.f32.mrf.mxu0
      %v849 = vadd.f32 0.0, %v848
      %850 = vmatmul.f32.gmra.mxu0 %v451
      %v851 = vpop.f32.mrf.mxu0
      %v852 = vadd.f32 0.0, %v851
      %853 = vmatmul.f32.gmra.mxu0 %v454
      %v854 = vpop.f32.mrf.mxu0
      %v855 = vadd.f32 0.0, %v854
      %856 = vmatmul.f32.gmra.mxu0 %v457
      %v857 = vpop.f32.mrf.mxu0
      %v858 = vadd.f32 0.0, %v857
      %859 = vmatmul.f32.gmra.mxu0 %v460
      %v860 = vpop.f32.mrf.mxu0
      %v861 = vadd.f32 0.0, %v860
      %862 = vmatmul.f32.gmra.mxu0 %v463
      %v863 = vpop.f32.mrf.mxu0
      %v864 = vadd.f32 0.0, %v863
      %865 = vmatmul.f32.gmra.mxu0 %v466
      %v866 = vpop.f32.mrf.mxu0
      %v867 = vadd.f32 0.0, %v866
      %868 = vmatmul.f32.gmra.mxu0 %v469
      %v869 = vpop.f32.mrf.mxu0
      %v870 = vadd.f32 0.0, %v869
      %871 = vmatmul.f32.gmra.mxu0 %v472
      %v872 = vpop.f32.mrf.mxu0
      %v873 = vadd.f32 0.0, %v872
      %874 = vmatmul.f32.gmra.mxu0 %v475
      %v875 = vpop.f32.mrf.mxu0
      %v876 = vadd.f32 0.0, %v875
      %877 = vmatmul.f32.gmra.mxu0 %v478
      %v878 = vpop.f32.mrf.mxu0
      %v879 = vadd.f32 0.0, %v878
      %880 = vmatmul.f32.gmra.mxu0 %v481
      %v881 = vpop.f32.mrf.mxu0
      %v882 = vadd.f32 0.0, %v881
      %883 = vmatmul.f32.gmra.mxu0 %v484
      %v884 = vpop.f32.mrf.mxu0
      %v885 = vadd.f32 0.0, %v884
      %886 = vmatmul.f32.gmra.mxu0 %v487
      %v887 = vpop.f32.mrf.mxu0
      %v888 = vadd.f32 0.0, %v887
      %889 = vmatmul.f32.gmra.mxu0 %v490
      %v890 = vpop.f32.mrf.mxu0
      %v891 = vadd.f32 0.0, %v890
      %892 = vmatmul.f32.gmra.mxu0 %v493
      %v893 = vpop.f32.mrf.mxu0
      %v894 = vadd.f32 0.0, %v893
      %895 = vmatmul.f32.gmra.mxu0 %v496
      %v896 = vpop.f32.mrf.mxu0
      %v897 = vadd.f32 0.0, %v896
      %898 = vmatmul.f32.gmra.mxu0 %v499
      %v899 = vpop.f32.mrf.mxu0
      %v900 = vadd.f32 0.0, %v899
      %901 = vmatmul.f32.gmra.mxu0 %v502
      %v902 = vpop.f32.mrf.mxu0
      %v903 = vadd.f32 0.0, %v902
      %904 = vmatmul.f32.gmra.mxu0 %v505
      %v905 = vpop.f32.mrf.mxu0
      %v906 = vadd.f32 0.0, %v905
      %907 = vmatmul.f32.gmra.mxu0 %v508
      %v908 = vpop.f32.mrf.mxu0
      %v909 = vadd.f32 0.0, %v908
      %910 = vmatmul.f32.gmra.mxu0 %v511
      %v911 = vpop.f32.mrf.mxu0
      %v912 = vadd.f32 0.0, %v911
      %913 = vmatmul.f32.gmra.mxu0 %v514
      %v914 = vpop.f32.mrf.mxu0
      %v915 = vadd.f32 0.0, %v914
      %916 = vmatmul.f32.gmra.mxu0 %v517
      %v917 = vpop.f32.mrf.mxu0
      %v918 = vadd.f32 0.0, %v917
      %919 = vmatmul.f32.gmra.mxu0 %v520
      %v920 = vpop.f32.mrf.mxu0
      %v921 = vadd.f32 0.0, %v920
      %922 = vmatmul.f32.gmra.mxu0 %v523
      %v923 = vpop.f32.mrf.mxu0
      %v924 = vadd.f32 0.0, %v923
      %925 = vmatmul.f32.gmra.mxu0 %v526
      %v926 = vpop.f32.mrf.mxu0
      %v927 = vadd.f32 0.0, %v926
      %928 = vmatmul.f32.gmra.mxu0 %v529
      %v929 = vpop.f32.mrf.mxu0
      %v930 = vadd.f32 0.0, %v929
      %931 = vmatmul.f32.gmra.mxu0 %v532
      %v932 = vpop.f32.mrf.mxu0
      %v933 = vadd.f32 0.0, %v932
      %934 = vmatmul.f32.gmra.mxu0 %v535
      %v935 = vpop.f32.mrf.mxu0
      %v936 = vadd.f32 0.0, %v935
      %937 = vmatmul.f32.gmra.mxu0 %v538
      %v938 = vpop.f32.mrf.mxu0
      %v939 = vadd.f32 0.0, %v938
      %940 = vmatmul.f32.gmra.mxu0 %v541
      %v941 = vpop.f32.mrf.mxu0
      %v942 = vadd.f32 0.0, %v941
      %943 = vmatmul.f32.gmra.mxu0 %v544
      %v944 = vpop.f32.mrf.mxu0
      %v945 = vadd.f32 0.0, %v944
      %946 = vmatmul.f32.gmra.mxu0 %v547
      %v947 = vpop.f32.mrf.mxu0
      %v948 = vadd.f32 0.0, %v947
      %949 = vmatmul.f32.gmra.mxu0 %v550
      %v950 = vpop.f32.mrf.mxu0
      %v951 = vadd.f32 0.0, %v950
      %952 = vmatmul.f32.gmra.mxu0 %v553
      %v953 = vpop.f32.mrf.mxu0
      %v954 = vadd.f32 0.0, %v953
      %955 = vmatmul.f32.gmra.mxu0 %v556
      %v956 = vpop.f32.mrf.mxu0
      %v957 = vadd.f32 0.0, %v956
      %958 = vmatmul.f32.gmra.mxu0 %v559
      %v959 = vpop.f32.mrf.mxu0
      %v960 = vadd.f32 0.0, %v959
      %961 = vmatmul.f32.gmra.mxu0 %v562
      %v962 = vpop.f32.mrf.mxu0
      %v963 = vadd.f32 0.0, %v962
      %964 = vmatmul.f32.gmra.mxu0 %v565
      %v965 = vpop.f32.mrf.mxu0
      %v966 = vadd.f32 0.0, %v965
      %967 = vmatmul.f32.gmra.mxu0 %v568
      %v968 = vpop.f32.mrf.mxu0
      %v969 = vadd.f32 0.0, %v968
      %970 = vmatmul.f32.gmra.mxu0 %v571
      %v971 = vpop.f32.mrf.mxu0
      %v972 = vadd.f32 0.0, %v971
      %973 = vmatmul.f32.gmra.mxu0 %v574
      %v974 = vpop.f32.mrf.mxu0
      %v975 = vadd.f32 0.0, %v974
      %976 = vmatmul.f32.gmra.mxu0 %v577
      %v977 = vpop.f32.mrf.mxu0
      %v978 = vadd.f32 0.0, %v977
      %979 = vmatmul.f32.gmra.mxu0 %v580
      %v980 = vpop.f32.mrf.mxu0
      %v981 = vadd.f32 0.0, %v980
      %982 = vmatmul.f32.gmra.mxu0 %v583
      %v983 = vpop.f32.mrf.mxu0
      %v984 = vadd.f32 0.0, %v983
      %985 = vmatmul.f32.gmra.mxu0 %v586
      %v986 = vpop.f32.mrf.mxu0
      %v987 = vadd.f32 0.0, %v986
      %988 = vmatmul.f32.gmra.mxu0 %v589
      %v989 = vpop.f32.mrf.mxu0
      %v990 = vadd.f32 0.0, %v989
      %991 = vmatmul.f32.gmra.mxu0 %v592
      %v992 = vpop.f32.mrf.mxu0
      %v993 = vadd.f32 0.0, %v992
      %994 = vmatmul.f32.gmra.mxu0 %v595
      %v995 = vpop.f32.mrf.mxu0
      %v996 = vadd.f32 0.0, %v995
      %997 = vmatmul.f32.gmra.mxu0 %v598
      %v998 = vpop.f32.mrf.mxu0
      %v999 = vadd.f32 0.0, %v998
      %1000 = vmatmul.f32.gmra.mxu0 %v601
      %v1001 = vpop.f32.mrf.mxu0
      %v1002 = vadd.f32 0.0, %v1001
      %1003 = vmatmul.f32.gmra.mxu0 %v604
      %v1004 = vpop.f32.mrf.mxu0
      %v1005 = vadd.f32 0.0, %v1004
      %1006 = vmatmul.f32.gmra.mxu0 %v607
      %v1007 = vpop.f32.mrf.mxu0
      %v1008 = vadd.f32 0.0, %v1007
      %1009 = vmatmul.f32.gmra.mxu0 %v610
      %v1010 = vpop.f32.mrf.mxu0
      %v1011 = vadd.f32 0.0, %v1010
      %1012 = vmatmul.f32.gmra.mxu0 %v613
      %v1013 = vpop.f32.mrf.mxu0
      %v1014 = vadd.f32 0.0, %v1013
      %1015 = vmatmul.f32.gmra.mxu0 %v616
      %v1016 = vpop.f32.mrf.mxu0
      %v1017 = vadd.f32 0.0, %v1016
      %1018 = vmatmul.f32.gmra.mxu0 %v619
      %v1019 = vpop.f32.mrf.mxu0
      %v1020 = vadd.f32 0.0, %v1019
      %1021 = vmatmul.f32.gmra.mxu0 %v622
      %v1022 = vpop.f32.mrf.mxu0
      %v1023 = vadd.f32 0.0, %v1022
      %1024 = vmatmul.f32.gmra.mxu0 %v625
      %v1025 = vpop.f32.mrf.mxu0
      %v1026 = vadd.f32 0.0, %v1025
      %1027 = vmatmul.f32.gmra.mxu0 %v628
      %v1028 = vpop.f32.mrf.mxu0
      %v1029 = vadd.f32 0.0, %v1028
      %1030 = vmatmul.f32.gmra.mxu0 %v631
      %v1031 = vpop.f32.mrf.mxu0
      %v1032 = vadd.f32 0.0, %v1031
      %1033 = vmatmul.f32.gmra.mxu0 %v634
      %v1034 = vpop.f32.mrf.mxu0
      %v1035 = vadd.f32 0.0, %v1034
      %1036 = vmatmul.f32.gmra.mxu0 %v637
      %v1037 = vpop.f32.mrf.mxu0
      %v1038 = vadd.f32 0.0, %v1037
      %1039 = vmatmul.f32.gmra.mxu0 %v640
      %v1040 = vpop.f32.mrf.mxu0
      %v1041 = vadd.f32 0.0, %v1040
      %1042 = vmatmul.f32.gmra.mxu0 %v643
      %v1043 = vpop.f32.mrf.mxu0
      %v1044 = vadd.f32 0.0, %v1043
      %1045 = vmatmul.f32.gmra.mxu0 %v646
      %v1046 = vpop.f32.mrf.mxu0
      %v1047 = vadd.f32 0.0, %v1046
      %1048 = vmatmul.f32.gmra.mxu0 %v649
      %v1049 = vpop.f32.mrf.mxu0
      %v1050 = vadd.f32 0.0, %v1049
      %1051 = vmatmul.f32.gmra.mxu0 %v652
      %v1052 = vpop.f32.mrf.mxu0
      %v1053 = vadd.f32 0.0, %v1052
      %1054 = vmatmul.f32.gmra.mxu0 %v655
      %v1055 = vpop.f32.mrf.mxu0
      %v1056 = vadd.f32 0.0, %v1055
      %1057 = vmatmul.f32.gmra.mxu0 %v658
      %v1058 = vpop.f32.mrf.mxu0
      %v1059 = vadd.f32 0.0, %v1058
      %1060 = vmatmul.f32.gmra.mxu0 %v661
      %v1061 = vpop.f32.mrf.mxu0
      %v1062 = vadd.f32 0.0, %v1061
      %1063 = vmatmul.f32.gmra.mxu0 %v664
      %v1064 = vpop.f32.mrf.mxu0
      %v1065 = vadd.f32 0.0, %v1064
      %1066 = vmatmul.f32.gmra.mxu0 %v667
      %v1067 = vpop.f32.mrf.mxu0
      %v1068 = vadd.f32 0.0, %v1067
      %1069 = vmatmul.f32.gmra.mxu0 %v670
      %v1070 = vpop.f32.mrf.mxu0
      %v1071 = vadd.f32 0.0, %v1070
      %1072 = vmatmul.f32.gmra.mxu0 %v673
      %v1073 = vpop.f32.mrf.mxu0
      %v1074 = vadd.f32 0.0, %v1073
      %1075 = vmatmul.f32.gmra.mxu0 %v676
      %v1076 = vpop.f32.mrf.mxu0
      %v1077 = vadd.f32 0.0, %v1076
      %1078 = vmatmul.f32.gmra.mxu0 %v679
      %v1079 = vpop.f32.mrf.mxu0
      %v1080 = vadd.f32 0.0, %v1079
      %1081 = vmatmul.f32.gmra.mxu0 %v682
      %v1082 = vpop.f32.mrf.mxu0
      %v1083 = vadd.f32 0.0, %v1082
      %1084 = vdwg.mxu0
      %vm1085 = vcmask 7168
      %1086 = vst.msk [vmem:[%s165] sm:$0xff] %vm1085, %v702
      %1087 = vst.msk [vmem:[%s165 + $0x8] sm:$0xff] %vm1085, %v705
      %1088 = vst.msk [vmem:[%s165 + $0x10] sm:$0xff] %vm1085, %v708
      %1089 = vst.msk [vmem:[%s165 + $0x18] sm:$0xff] %vm1085, %v711
      %1090 = vst.msk [vmem:[%s165 + $0x20] sm:$0xff] %vm1085, %v714
      %1091 = vst.msk [vmem:[%s165 + $0x28] sm:$0xff] %vm1085, %v717
      %1092 = vst.msk [vmem:[%s165 + $0x30] sm:$0xff] %vm1085, %v720
      %1093 = vst.msk [vmem:[%s165 + $0x38] sm:$0xff] %vm1085, %v723
      %1094 = vst.msk [vmem:[%s165 + $0x40] sm:$0xff] %vm1085, %v726
      %1095 = vst.msk [vmem:[%s165 + $0x48] sm:$0xff] %vm1085, %v729
      %1096 = vst.msk [vmem:[%s165 + $0x50] sm:$0xff] %vm1085, %v732
      %1097 = vst.msk [vmem:[%s165 + $0x58] sm:$0xff] %vm1085, %v735
      %1098 = vst.msk [vmem:[%s165 + $0x60] sm:$0xff] %vm1085, %v738
      %1099 = vst.msk [vmem:[%s165 + $0x68] sm:$0xff] %vm1085, %v741
      %1100 = vst.msk [vmem:[%s165 + $0x70] sm:$0xff] %vm1085, %v744
      %1101 = vst.msk [vmem:[%s165 + $0x78] sm:$0xff] %vm1085, %v747
      %1102 = vst.msk [vmem:[%s165 + $0x80] sm:$0xff] %vm1085, %v750
      %1103 = vst.msk [vmem:[%s165 + $0x88] sm:$0xff] %vm1085, %v753
      %1104 = vst.msk [vmem:[%s165 + $0x90] sm:$0xff] %vm1085, %v756
      %1105 = vst.msk [vmem:[%s165 + $0x98] sm:$0xff] %vm1085, %v759
      %1106 = vst.msk [vmem:[%s165 + $0xa0] sm:$0xff] %vm1085, %v762
      %1107 = vst.msk [vmem:[%s165 + $0xa8] sm:$0xff] %vm1085, %v765
      %1108 = vst.msk [vmem:[%s165 + $0xb0] sm:$0xff] %vm1085, %v768
      %1109 = vst.msk [vmem:[%s165 + $0xb8] sm:$0xff] %vm1085, %v771
      %1110 = vst.msk [vmem:[%s165 + $0xc0] sm:$0xff] %vm1085, %v774
      %1111 = vst.msk [vmem:[%s165 + $0xc8] sm:$0xff] %vm1085, %v777
      %1112 = vst.msk [vmem:[%s165 + $0xd0] sm:$0xff] %vm1085, %v780
      %1113 = vst.msk [vmem:[%s165 + $0xd8] sm:$0xff] %vm1085, %v783
      %1114 = vst.msk [vmem:[%s165 + $0xe0] sm:$0xff] %vm1085, %v786
      %1115 = vst.msk [vmem:[%s165 + $0xe8] sm:$0xff] %vm1085, %v789
      %1116 = vst.msk [vmem:[%s165 + $0xf0] sm:$0xff] %vm1085, %v792
      %1117 = vst.msk [vmem:[%s165 + $0xf8] sm:$0xff] %vm1085, %v795
      %1118 = vst.msk [vmem:[%s165 + $0x100] sm:$0xff] %vm1085, %v798
      %1119 = vst.msk [vmem:[%s165 + $0x108] sm:$0xff] %vm1085, %v801
      %1120 = vst.msk [vmem:[%s165 + $0x110] sm:$0xff] %vm1085, %v804
      %1121 = vst.msk [vmem:[%s165 + $0x118] sm:$0xff] %vm1085, %v807
      %1122 = vst.msk [vmem:[%s165 + $0x120] sm:$0xff] %vm1085, %v810
      %1123 = vst.msk [vmem:[%s165 + $0x128] sm:$0xff] %vm1085, %v813
      %1124 = vst.msk [vmem:[%s165 + $0x130] sm:$0xff] %vm1085, %v816
      %1125 = vst.msk [vmem:[%s165 + $0x138] sm:$0xff] %vm1085, %v819
      %1126 = vst.msk [vmem:[%s165 + $0x140] sm:$0xff] %vm1085, %v822
      %1127 = vst.msk [vmem:[%s165 + $0x148] sm:$0xff] %vm1085, %v825
      %1128 = vst.msk [vmem:[%s165 + $0x150] sm:$0xff] %vm1085, %v828
      %1129 = vst.msk [vmem:[%s165 + $0x158] sm:$0xff] %vm1085, %v831
      %1130 = vst.msk [vmem:[%s165 + $0x160] sm:$0xff] %vm1085, %v834
      %1131 = vst.msk [vmem:[%s165 + $0x168] sm:$0xff] %vm1085, %v837
      %1132 = vst.msk [vmem:[%s165 + $0x170] sm:$0xff] %vm1085, %v840
      %1133 = vst.msk [vmem:[%s165 + $0x178] sm:$0xff] %vm1085, %v843
      %1134 = vst.msk [vmem:[%s165 + $0x180] sm:$0xff] %vm1085, %v846
      %1135 = vst.msk [vmem:[%s165 + $0x188] sm:$0xff] %vm1085, %v849
      %1136 = vst.msk [vmem:[%s165 + $0x190] sm:$0xff] %vm1085, %v852
      %1137 = vst.msk [vmem:[%s165 + $0x198] sm:$0xff] %vm1085, %v855
      %1138 = vst.msk [vmem:[%s165 + $0x1a0] sm:$0xff] %vm1085, %v858
      %1139 = vst.msk [vmem:[%s165 + $0x1a8] sm:$0xff] %vm1085, %v861
      %1140 = vst.msk [vmem:[%s165 + $0x1b0] sm:$0xff] %vm1085, %v864
      %1141 = vst.msk [vmem:[%s165 + $0x1b8] sm:$0xff] %vm1085, %v867
      %1142 = vst.msk [vmem:[%s165 + $0x1c0] sm:$0xff] %vm1085, %v870
      %1143 = vst.msk [vmem:[%s165 + $0x1c8] sm:$0xff] %vm1085, %v873
      %1144 = vst.msk [vmem:[%s165 + $0x1d0] sm:$0xff] %vm1085, %v876
      %1145 = vst.msk [vmem:[%s165 + $0x1d8] sm:$0xff] %vm1085, %v879
      %1146 = vst.msk [vmem:[%s165 + $0x1e0] sm:$0xff] %vm1085, %v882
      %1147 = vst.msk [vmem:[%s165 + $0x1e8] sm:$0xff] %vm1085, %v885
      %1148 = vst.msk [vmem:[%s165 + $0x1f0] sm:$0xff] %vm1085, %v888
      %1149 = vst.msk [vmem:[%s165 + $0x1f8] sm:$0xff] %vm1085, %v891
      %1150 = vst.msk [vmem:[%s165 + $0x200] sm:$0xff] %vm1085, %v894
      %1151 = vst.msk [vmem:[%s165 + $0x208] sm:$0xff] %vm1085, %v897
      %1152 = vst.msk [vmem:[%s165 + $0x210] sm:$0xff] %vm1085, %v900
      %1153 = vst.msk [vmem:[%s165 + $0x218] sm:$0xff] %vm1085, %v903
      %1154 = vst.msk [vmem:[%s165 + $0x220] sm:$0xff] %vm1085, %v906
      %1155 = vst.msk [vmem:[%s165 + $0x228] sm:$0xff] %vm1085, %v909
      %1156 = vst.msk [vmem:[%s165 + $0x230] sm:$0xff] %vm1085, %v912
      %1157 = vst.msk [vmem:[%s165 + $0x238] sm:$0xff] %vm1085, %v915
      %1158 = vst.msk [vmem:[%s165 + $0x240] sm:$0xff] %vm1085, %v918
      %1159 = vst.msk [vmem:[%s165 + $0x248] sm:$0xff] %vm1085, %v921
      %1160 = vst.msk [vmem:[%s165 + $0x250] sm:$0xff] %vm1085, %v924
      %1161 = vst.msk [vmem:[%s165 + $0x258] sm:$0xff] %vm1085, %v927
      %1162 = vst.msk [vmem:[%s165 + $0x260] sm:$0xff] %vm1085, %v930
      %1163 = vst.msk [vmem:[%s165 + $0x268] sm:$0xff] %vm1085, %v933
      %1164 = vst.msk [vmem:[%s165 + $0x270] sm:$0xff] %vm1085, %v936
      %1165 = vst.msk [vmem:[%s165 + $0x278] sm:$0xff] %vm1085, %v939
      %1166 = vst.msk [vmem:[%s165 + $0x280] sm:$0xff] %vm1085, %v942
      %1167 = vst.msk [vmem:[%s165 + $0x288] sm:$0xff] %vm1085, %v945
      %1168 = vst.msk [vmem:[%s165 + $0x290] sm:$0xff] %vm1085, %v948
      %1169 = vst.msk [vmem:[%s165 + $0x298] sm:$0xff] %vm1085, %v951
      %1170 = vst.msk [vmem:[%s165 + $0x2a0] sm:$0xff] %vm1085, %v954
      %1171 = vst.msk [vmem:[%s165 + $0x2a8] sm:$0xff] %vm1085, %v957
      %1172 = vst.msk [vmem:[%s165 + $0x2b0] sm:$0xff] %vm1085, %v960
      %1173 = vst.msk [vmem:[%s165 + $0x2b8] sm:$0xff] %vm1085, %v963
      %1174 = vst.msk [vmem:[%s165 + $0x2c0] sm:$0xff] %vm1085, %v966
      %1175 = vst.msk [vmem:[%s165 + $0x2c8] sm:$0xff] %vm1085, %v969
      %1176 = vst.msk [vmem:[%s165 + $0x2d0] sm:$0xff] %vm1085, %v972
      %1177 = vst.msk [vmem:[%s165 + $0x2d8] sm:$0xff] %vm1085, %v975
      %1178 = vst.msk [vmem:[%s165 + $0x2e0] sm:$0xff] %vm1085, %v978
      %1179 = vst.msk [vmem:[%s165 + $0x2e8] sm:$0xff] %vm1085, %v981
      %1180 = vst.msk [vmem:[%s165 + $0x2f0] sm:$0xff] %vm1085, %v984
      %1181 = vst.msk [vmem:[%s165 + $0x2f8] sm:$0xff] %vm1085, %v987
      %1182 = vst.msk [vmem:[%s165 + $0x300] sm:$0xff] %vm1085, %v990
      %1183 = vst.msk [vmem:[%s165 + $0x308] sm:$0xff] %vm1085, %v993
      %1184 = vst.msk [vmem:[%s165 + $0x310] sm:$0xff] %vm1085, %v996
      %1185 = vst.msk [vmem:[%s165 + $0x318] sm:$0xff] %vm1085, %v999
      %1186 = vst.msk [vmem:[%s165 + $0x320] sm:$0xff] %vm1085, %v1002
      %1187 = vst.msk [vmem:[%s165 + $0x328] sm:$0xff] %vm1085, %v1005
      %1188 = vst.msk [vmem:[%s165 + $0x330] sm:$0xff] %vm1085, %v1008
      %1189 = vst.msk [vmem:[%s165 + $0x338] sm:$0xff] %vm1085, %v1011
      %1190 = vst.msk [vmem:[%s165 + $0x340] sm:$0xff] %vm1085, %v1014
      %1191 = vst.msk [vmem:[%s165 + $0x348] sm:$0xff] %vm1085, %v1017
      %1192 = vst.msk [vmem:[%s165 + $0x350] sm:$0xff] %vm1085, %v1020
      %1193 = vst.msk [vmem:[%s165 + $0x358] sm:$0xff] %vm1085, %v1023
      %1194 = vst.msk [vmem:[%s165 + $0x360] sm:$0xff] %vm1085, %v1026
      %1195 = vst.msk [vmem:[%s165 + $0x368] sm:$0xff] %vm1085, %v1029
      %1196 = vst.msk [vmem:[%s165 + $0x370] sm:$0xff] %vm1085, %v1032
      %1197 = vst.msk [vmem:[%s165 + $0x378] sm:$0xff] %vm1085, %v1035
      %1198 = vst.msk [vmem:[%s165 + $0x380] sm:$0xff] %vm1085, %v1038
      %1199 = vst.msk [vmem:[%s165 + $0x388] sm:$0xff] %vm1085, %v1041
      %1200 = vst.msk [vmem:[%s165 + $0x390] sm:$0xff] %vm1085, %v1044
      %1201 = vst.msk [vmem:[%s165 + $0x398] sm:$0xff] %vm1085, %v1047
      %1202 = vst.msk [vmem:[%s165 + $0x3a0] sm:$0xff] %vm1085, %v1050
      %1203 = vst.msk [vmem:[%s165 + $0x3a8] sm:$0xff] %vm1085, %v1053
      %1204 = vst.msk [vmem:[%s165 + $0x3b0] sm:$0xff] %vm1085, %v1056
      %1205 = vst.msk [vmem:[%s165 + $0x3b8] sm:$0xff] %vm1085, %v1059
      %1206 = vst.msk [vmem:[%s165 + $0x3c0] sm:$0xff] %vm1085, %v1062
      %1207 = vst.msk [vmem:[%s165 + $0x3c8] sm:$0xff] %vm1085, %v1065
      %1208 = vst.msk [vmem:[%s165 + $0x3d0] sm:$0xff] %vm1085, %v1068
      %1209 = vst.msk [vmem:[%s165 + $0x3d8] sm:$0xff] %vm1085, %v1071
      %1210 = vst.msk [vmem:[%s165 + $0x3e0] sm:$0xff] %vm1085, %v1074
      %1211 = vst.msk [vmem:[%s165 + $0x3e8] sm:$0xff] %vm1085, %v1077
      %1212 = vst.msk [vmem:[%s165 + $0x3f0] sm:$0xff] %vm1085, %v1080
      %1213 = vst.msk [vmem:[%s165 + $0x3f8] sm:$0xff] %vm1085, %v1083
      %s1214 = smul.u32 128, %s13
      %p1215 = scmp.lt.s32.totalorder %s1214, 255
      %s1216 = scalar_select %p1215, %s1214, 255
      %s1217 = smul.addr %s1216, 8
      %s1218 = scalar_lea.vmem %s2, %s1217
      // Predicated region
      $region29: #{linear_regression_forward.1} parent=27 // pred_check
        %p1219 = pneg %p78
      $region30: #{linear_regression_forward.1} parent=27 // pred_check_branch
        %1221 = sbr.rel (%p1219) target = $region32
      $region31: #{linear_regression_forward.1} parent=27 // pred_region
        %s1222 = smul.u32 128, %s13
      $region32: #{linear_regression_forward.1} parent=27 // pred_fallthru
        _
    $region28: #{linear_regression_forward.1} parent=5 // pred_fallthru
      _
    %p1223 = scmp.le.s32.totalorder 2, %s8
    // Predicated region
    $region33: #{linear_regression_forward.1} parent=5 // pred_check
      %p1224 = pneg %p1223
    $region34: #{linear_regression_forward.1} parent=5 // pred_check_branch
      %1226 = sbr.rel (%p1224) target = $region36
    $region35: #{linear_regression_forward.1} parent=5 // pred_region
      %s1227 = ssub.s32 %s8, 2
      // Predicated region
      $region37: #{linear_regression_forward.1} parent=35 // pred_check
        %p1228 = pneg %p84
      $region38: #{linear_regression_forward.1} parent=35 // pred_check_branch
        %1230 = sbr.rel (%p1228) target = $region40
      $region39: #{linear_regression_forward.1} parent=35 // pred_region
        %s1231 = smul.u32 128, %s14
        %p1232 = scmp.lt.s32.totalorder %s1231, 255
        %s1233 = scalar_select %p1232, %s1231, 255
        %s1234 = smul.addr %s1233, 8
        %s1235 = scalar_lea.vmem %s2, %s1234
      $region40: #{linear_regression_forward.1} parent=35 // pred_fallthru
        _
    $region36: #{linear_regression_forward.1} parent=5 // pred_fallthru
      _
  $region6: #{linear_regression_forward.1} parent=0 // loop_footer
    %s12 = sadd.s32 1, %s8
  $region7: #{linear_regression_forward.1} parent=0 // loop_footer_branch
    %7 = sbr.rel target = $region3
  $region8: #{linear_regression_forward.1} parent=0 // loop_exit
    _

</llo_original>
